<compile_context>
chip_gen: v7x
topology: tpu7x:2x2x1
jax: 0.10.0
libtpu: 0.0.40
codegen_flags: <defaults>
</compile_context>

<pallas_src>
import functools

import jax
import jax.numpy as jnp
from jax.experimental import pallas as pl
from jax.experimental.pallas import tpu as pltpu


# ---------------------------------------------------------------------------
# Hardware / budget helpers
# ---------------------------------------------------------------------------

def _vmem_capacity_bytes():
    """Per-core VMEM capacity; conservative (v7x) fallback if the query fails."""
    try:
        info = pltpu.get_tpu_info()
        cap = getattr(info, "vmem_capacity_bytes", None)
        if cap:
            return int(cap)
    except Exception:
        pass
    return 64 << 20  # v7x per-TensorCore VMEM; safe lower bound for v5e/v6e too


def _vmem_limit(need_bytes, capacity):
    """Explicit scoped-VMEM limit: generous around `need`, capped below physical."""
    return int(min(capacity - (2 << 20), max(need_bytes + (2 << 20), 16 << 20)))


_HW_TILE_CANDIDATES = (16384, 8192, 4096, 2048, 1024, 512, 256, 128)


def _pick_hw_tile(hw, c, itemsize, budget_bytes):
    """Largest lane-aligned HW tile within the per-tile VMEM budget."""
    for cand in _HW_TILE_CANDIDATES:
        if c * cand * itemsize <= budget_bytes:
            if hw <= cand:
                return hw      # whole spatial extent as one block (== full dim)
            return cand        # 128-multiple tile; cdiv grid (+ mask) covers tails
    return min(hw, 128)        # pathological C: smallest legal lane tile


# ---------------------------------------------------------------------------
# Kernels
# ---------------------------------------------------------------------------

def _fused_kernel(x_ref, w1_ref, w2_ref, o_ref, *, hw_total):
    """Pool + MLP + sigmoid + rescale on one resident (C, HW) sample slab."""
    x = x_ref[0]                                                  # (C, HW) native dtype
    s = jnp.sum(x.astype(jnp.float32), axis=-1, keepdims=True)    # (C, 1) f32
    m = jnp.max(x, axis=-1, keepdims=True).astype(jnp.float32)    # (C, 1) f32
    avg = s * (1.0 / hw_total)
    # Stack [avg | max] into (C, 2) without a lane-dim concatenate.
    lane = jax.lax.broadcasted_iota(jnp.int32, (avg.shape[0], 2), 1)
    pooled = jnp.where(lane == 0, avg, m)                         # (C, 2)
    hid = jnp.maximum(
        jnp.dot(w1_ref[...], pooled, preferred_element_type=jnp.float32), 0.0)   # (Cr, 2)
    out2 = jnp.dot(w2_ref[...], hid, preferred_element_type=jnp.float32)         # (C, 2)
    attn = jax.nn.sigmoid(out2[:, 0:1] + out2[:, 1:2])            # (C, 1) f32
    o_ref[0] = x * attn.astype(x_ref.dtype)


def _pool_stats_kernel(x_ref, stats_ref, sum_sc, max_sc, *, hw_total, thw, mask_tail):
    """Pass 1: running spatial sum/max over HW tiles -> (1, C, 2) [sum, max]."""
    h = pl.program_id(1)

    @pl.when(h == 0)
    def _():
        sum_sc[...] = jnp.zeros_like(sum_sc)
        max_sc[...] = jnp.full_like(max_sc, -jnp.inf)

    # Only the current tile is promoted to f32; no full-array copy anywhere.
    x = x_ref[0].astype(jnp.float32)                              # (C, thw)
    if mask_tail:
        lane = jax.lax.broadcasted_iota(jnp.int32, x.shape, 1)
        valid = (h * thw + lane) < hw_total
        xs = jnp.where(valid, x, 0.0)
        xm = jnp.where(valid, x, -jnp.inf)
    else:
        xs, xm = x, x
    sum_sc[...] += jnp.sum(xs, axis=-1, keepdims=True)            # (C, 1)
    max_sc[...] = jnp.maximum(max_sc[...], jnp.max(xm, axis=-1, keepdims=True))

    @pl.when(h == pl.num_programs(1) - 1)
    def _():
        col = jax.lax.broadcasted_iota(jnp.int32, (sum_sc.shape[0], 2), 1)
        stats_ref[0] = jnp.where(col == 0, sum_sc[...], max_sc[...])   # (C, 2)


def _rescale_kernel(x_ref, attn_ref, o_ref):
    """Pass 2: per-channel rescale; attn column broadcasts over the lane axis."""
    o_ref[0] = x_ref[0] * attn_ref[0].astype(x_ref.dtype)


# ---------------------------------------------------------------------------
# Wrappers
# ---------------------------------------------------------------------------

def _attention_from_stats(stats, w1m, w2m, hw):
    """Tiny shared MLP + sigmoid in plain JAX (hoisted out of the hot kernel)."""
    ssum = stats[..., 0]                                          # (N, C)
    smax = stats[..., 1]                                          # (N, C)
    avg = ssum * (1.0 / hw)

    def fc(p):
        h = jnp.maximum(p @ w1m.T, 0.0)
        return h @ w2m.T

    return jax.nn.sigmoid(fc(avg) + fc(smax))[..., None]          # (N, C, 1) f32


def _xla_channel_attention(x_nch, w1m, w2m):
    """Plain-XLA path for tiny pyramid levels where launch overhead dominates."""
    avg = jnp.mean(x_nch, axis=-1)
    mx = jnp.max(x_nch, axis=-1)

    def fc(p):
        h = jnp.maximum(p @ w1m.T, 0.0)
        return h @ w2m.T

    attn = jax.nn.sigmoid(fc(avg) + fc(mx))
    return x_nch * attn[..., None].astype(x_nch.dtype)


def channel_attention_apply(x_nchw, w1, w2, *, force_path=None, hw_tile=None,
                            xla_fallback_max_bytes=0):
    """ChannelAttention + rescale for one NCHW feature.

    force_path: None (auto) | "fused" | "two_pass" | "xla".
    hw_tile: optional override for the two-pass HW tile (multiple of 128 or >= HW).
    xla_fallback_max_bytes: auto path uses plain XLA below this feature size.
    """
    N, C, H, W = x_nchw.shape
    Cr = w1.shape[0]
    HW = H * W
    itemsize = jnp.dtype(x_nchw.dtype).itemsize

    x_nch = x_nchw.reshape(N, C, HW)          # pure reshape — no HBM transpose
    w1m = w1.reshape(Cr, C)
    w2m = w2.reshape(C, Cr)

    capacity = _vmem_capacity_bytes()
    slab_bytes = C * HW * itemsize
    weight_bytes = 2 * Cr * C * 4
    total_bytes = N * slab_bytes

    # Fused path needs 2 double-buffered (C, HW) windows (in + out) plus f32
    # pooling temps for low-precision inputs.
    slab_mult = 4 if x_nchw.dtype == jnp.float32 else 6
    fused_need = slab_mult * slab_bytes + 4 * weight_bytes + (1 << 20)
    fused_budget = (capacity * 3) // 8        # 48 MiB on v5e/v6e, 24 MiB on v7x

    if force_path is None:
        if total_bytes <= xla_fallback_max_bytes:
            path = "xla"
        elif fused_need <= fused_budget:
            path = "fused"
        else:
            path = "two_pass"
    else:
        path = force_path

    if path == "xla":
        return _xla_channel_attention(x_nch, w1m, w2m).reshape(N, C, H, W)

    if path == "fused":
        # ---- single pass: pool + MLP + sigmoid + rescale, read-once/write-once ----
        out = pl.pallas_call(
            functools.partial(_fused_kernel, hw_total=float(HW)),
            out_shape=jax.ShapeDtypeStruct((N, C, HW), x_nchw.dtype),
            grid_spec=pltpu.PrefetchScalarGridSpec(
                num_scalar_prefetch=0,
                grid=(N,),
                in_specs=[
                    pl.BlockSpec((1, C, HW), lambda n: (n, 0, 0)),
                    pl.BlockSpec((Cr, C), lambda n: (0, 0)),
                    pl.BlockSpec((C, Cr), lambda n: (0, 0)),
                ],
                out_specs=pl.BlockSpec((1, C, HW), lambda n: (n, 0, 0)),
            ),
            compiler_params=pltpu.CompilerParams(
                dimension_semantics=("parallel",),
                vmem_limit_bytes=_vmem_limit(fused_need, capacity)),
            cost_estimate=pl.CostEstimate(
                flops=3 * N * C * HW + 8 * N * C * Cr,
                transcendentals=N * C,
                bytes_accessed=2 * N * C * HW * itemsize),
            # TODO(synk): input_output_aliases={0: 0} would drop one HBM allocation
            # when the caller can discard the input feature (capacity win only).
        )(x_nch, w1m, w2m)
        return out.reshape(N, C, H, W)

    # ---- two-pass streaming path (levels too large for a resident slab) ----
    tile_budget = 4 << 20                     # >=512 lanes for big C -> ~85% of roofline
    thw = hw_tile if hw_tile is not None else _pick_hw_tile(HW, C, itemsize, tile_budget)
    n_hw = (HW + thw - 1) // thw
    mask_tail = (HW % thw) != 0
    tile_bytes = C * thw * itemsize
    tile_f32 = C * thw * 4

    # pass 1: pooled statistics (sum, max) in f32
    stats = pl.pallas_call(
        functools.partial(_pool_stats_kernel, hw_total=HW, thw=thw, mask_tail=mask_tail),
        out_shape=jax.ShapeDtypeStruct((N, C, 2), jnp.float32),
        grid_spec=pltpu.PrefetchScalarGridSpec(
            num_scalar_prefetch=0,
            grid=(N, n_hw),
            in_specs=[pl.BlockSpec((1, C, thw), lambda n, h: (n, 0, h))],
            out_specs=pl.BlockSpec((1, C, 2), lambda n, h: (n, 0, 0)),
            scratch_shapes=[pltpu.VMEM((C, 1), jnp.float32),
                            pltpu.VMEM((C, 1), jnp.float32)],
        ),
        compiler_params=pltpu.CompilerParams(
            dimension_semantics=("parallel", "arbitrary"),
            vmem_limit_bytes=_vmem_limit(2 * tile_bytes + 2 * tile_f32, capacity)),
        cost_estimate=pl.CostEstimate(
            flops=2 * N * C * HW,
            transcendentals=0,
            bytes_accessed=N * C * HW * itemsize + N * C * 8),
    )(x_nch)

    # tiny MLP + sigmoid in plain JAX, batched over N
    attn = _attention_from_stats(stats, w1m, w2m, float(HW))      # (N, C, 1) f32

    # pass 2: rescale the feature in its native dtype
    out = pl.pallas_call(
        _rescale_kernel,
        out_shape=jax.ShapeDtypeStruct((N, C, HW), x_nchw.dtype),
        grid_spec=pltpu.PrefetchScalarGridSpec(
            num_scalar_prefetch=0,
            grid=(N, n_hw),
            in_specs=[
                pl.BlockSpec((1, C, thw), lambda n, h: (n, 0, h)),
                pl.BlockSpec((1, C, 1), lambda n, h: (n, 0, 0)),
            ],
            out_specs=pl.BlockSpec((1, C, thw), lambda n, h: (n, 0, h)),
        ),
        compiler_params=pltpu.CompilerParams(
            dimension_semantics=("parallel", "parallel"),
            vmem_limit_bytes=_vmem_limit(4 * tile_bytes + 2 * tile_f32, capacity)),
        cost_estimate=pl.CostEstimate(
            flops=N * C * HW,
            transcendentals=0,
            bytes_accessed=2 * N * C * HW * itemsize),
        # TODO(synk): input_output_aliases={0: 0} when the caller discards the input.
    )(x_nch, attn)

    return out.reshape(N, C, H, W)


def init_fpa_params(channels, ratio=16, seed=0):
    """Deterministic parameter init matching ChannelAttention.__init__ shapes."""
    key = jax.random.PRNGKey(seed)
    params = []
    for c in channels:
        cr = max(c // ratio, 1)
        key, k1, k2 = jax.random.split(key, 3)
        w1 = jax.random.normal(k1, (cr, c, 1, 1), jnp.float32) * 0.1  # fc[0].weight
        w2 = jax.random.normal(k2, (c, cr, 1, 1), jnp.float32) * 0.1  # fc[2].weight
        params.append((w1, w2))
    return params


def fpa_forward(features, params, *, xla_fallback_max_bytes=0):
    """FPA forward: independently re-weight every pyramid level (auto path)."""
    return [channel_attention_apply(f, w1, w2,
                                    xla_fallback_max_bytes=xla_fallback_max_bytes)
            for f, (w1, w2) in zip(features, params)]


def _reference_forward(features, params):
    """Pure-JAX reference (mirrors the PyTorch math) for verification."""
    outs = []
    for x, (w1, w2) in zip(features, params):
        N, C, H, W = x.shape
        Cr = w1.shape[0]
        w1m = w1.reshape(Cr, C)
        w2m = w2.reshape(C, Cr)
        avg = jnp.mean(x, axis=(2, 3))            # (N, C)
        mx = jnp.max(x, axis=(2, 3))              # (N, C)

        def fc(p):
            h = jnp.maximum(p @ w1m.T, 0.0)
            return h @ w2m.T

        attn = jax.nn.sigmoid(fc(avg) + fc(mx))   # (N, C)
        outs.append(x * attn[:, :, None, None])
    return outs


if __name__ == "__main__":
    # Small shapes consistent with the module (ratio=16 requires C >= 16).
    batch = 2
    channels = [32, 64, 32]
    spatials = [16, 8, 12]     # HW = 256, 64, 144 (144 exercises the masked tail)

    key = jax.random.PRNGKey(0)
    feats = []
    for c, s in zip(channels, spatials):
        key, sub = jax.random.split(key)
        feats.append(jax.random.normal(sub, (batch, c, s, s), jnp.float32))

    params = init_fpa_params(channels, ratio=16, seed=0)
    refs = _reference_forward(feats, params)

    def check(o, r):
        o = jax.block_until_ready(o)
        assert o.shape == r.shape and o.dtype == r.dtype
        assert jnp.allclose(o, r, rtol=1e-4, atol=1e-5), "mismatch vs reference"

    # Fused single-pass kernel (read-once / write-once), incl. non-128-divisible HW.
    check(channel_attention_apply(feats[0], *params[0], force_path="fused"), refs[0])
    check(channel_attention_apply(feats[2], *params[2], force_path="fused"), refs[2])

    # Streaming two-pass kernels: multi-tile divisible HW, single-tile, masked tail.
    check(channel_attention_apply(feats[0], *params[0], force_path="two_pass",
                                  hw_tile=128), refs[0])
    check(channel_attention_apply(feats[1], *params[1], force_path="two_pass"), refs[1])
    check(channel_attention_apply(feats[2], *params[2], force_path="two_pass",
                                  hw_tile=128), refs[2])

    # Auto path selection end-to-end (Pallas everywhere; XLA fallback disabled here
    # so the kernels are exercised at these tiny test shapes).
    outs = fpa_forward(feats, params)
    for o, r in zip(outs, refs):
        check(o, r)

    print("KERNEL_OK")
</pallas_src>

<mosaic_0001>
module attributes {stable_mosaic.version = 11 : i64} {
  func.func @_fused_kernel(%arg0: i32, %arg1: memref<1x32x256xf32, #tpu.memory_space<vmem>>, %arg2: memref<2x32xf32, #tpu.memory_space<vmem>>, %arg3: memref<32x2xf32, #tpu.memory_space<vmem>>, %arg4: memref<1x32x256xf32, #tpu.memory_space<vmem>>) attributes {dimension_semantics = [#tpu.dimension_semantics<parallel>], iteration_bounds = array<i64: 2>, scalar_prefetch = 0 : i64, scratch_operands = 0 : i64, tpu.core_type = #tpu.core_type<tc>, window_params = [{transform_indices = @transform_0, window_bounds = array<i64: 1, 32, 256>}, {pipeline_mode = #tpu.pipeline_mode<synchronous>, transform_indices = @transform_1, window_bounds = array<i64: 2, 32>}, {pipeline_mode = #tpu.pipeline_mode<synchronous>, transform_indices = @transform_2, window_bounds = array<i64: 32, 2>}, {transform_indices = @transform_3, window_bounds = array<i64: 1, 32, 256>}]} {
    %c0 = arith.constant 0 : index
    %c0_0 = arith.constant 0 : index
    %c0_1 = arith.constant 0 : index
    %0 = vector.load %arg1[%c0, %c0_0, %c0_1] : memref<1x32x256xf32, #tpu.memory_space<vmem>>, vector<1x32x256xf32>
    %1 = vector.shape_cast %0 : vector<1x32x256xf32> to vector<32x256xf32>
    %cst = arith.constant dense<0.000000e+00> : vector<32xf32>
    %2 = vector.multi_reduction <add>, %1, %cst [1] : vector<32x256xf32> to vector<32xf32>
    %3 = vector.shape_cast %2 : vector<32xf32> to vector<32x1xf32>
    %cst_2 = arith.constant dense<0xFF800000> : vector<32xf32>
    %4 = vector.multi_reduction <maximumf>, %1, %cst_2 [1] : vector<32x256xf32> to vector<32xf32>
    %5 = vector.shape_cast %4 : vector<32xf32> to vector<32x1xf32>
    %cst_3 = arith.constant 3.906250e-03 : f32
    %6 = vector.broadcast %cst_3 : f32 to vector<32x1xf32>
    %7 = arith.mulf %3, %6 : vector<32x1xf32>
    %8 = tpu.iota {dimensions = array<i32: 1>} : vector<32x2xi32>
    %c0_i32 = arith.constant 0 : i32
    %9 = vector.broadcast %c0_i32 : i32 to vector<32x2xi32>
    %10 = arith.cmpi eq, %8, %9 : vector<32x2xi32>
    %11 = vector.shape_cast %7 : vector<32x1xf32> to vector<32x1xf32>
    %12 = vector.broadcast %11 : vector<32x1xf32> to vector<32x2xf32>
    %13 = vector.shape_cast %5 : vector<32x1xf32> to vector<32x1xf32>
    %14 = vector.broadcast %13 : vector<32x1xf32> to vector<32x2xf32>
    %15 = arith.select %10, %12, %14 : vector<32x2xi1>, vector<32x2xf32>
    %c0_4 = arith.constant 0 : index
    %c0_5 = arith.constant 0 : index
    %16 = vector.load %arg2[%c0_4, %c0_5] : memref<2x32xf32, #tpu.memory_space<vmem>>, vector<2x32xf32>
    %cst_6 = arith.constant dense<0.000000e+00> : vector<2x2xf32>
    %17 = tpu.matmul %16, %15, %cst_6 {dimension_numbers = #tpu.dot_dimension_numbers<[1], [0], [0], [1], [0, 0, 1, 1], [], []>} : vector<2x32xf32>, vector<32x2xf32>, vector<2x2xf32> -> vector<2x2xf32>
    %cst_7 = arith.constant 0.000000e+00 : f32
    %18 = vector.broadcast %cst_7 : f32 to vector<2x2xf32>
    %19 = arith.maximumf %17, %18 : vector<2x2xf32>
    %c0_8 = arith.constant 0 : index
    %c0_9 = arith.constant 0 : index
    %20 = vector.load %arg3[%c0_8, %c0_9] : memref<32x2xf32, #tpu.memory_space<vmem>>, vector<32x2xf32>
    %cst_10 = arith.constant dense<0.000000e+00> : vector<32x2xf32>
    %21 = tpu.matmul %20, %19, %cst_10 {dimension_numbers = #tpu.dot_dimension_numbers<[1], [0], [0], [1], [0, 0, 1, 1], [], []>} : vector<32x2xf32>, vector<2x2xf32>, vector<32x2xf32> -> vector<32x2xf32>
    %22 = vector.extract_strided_slice %21 {offsets = [0, 0], sizes = [32, 1], strides = [1, 1]} : vector<32x2xf32> to vector<32x1xf32>
    %23 = vector.extract_strided_slice %21 {offsets = [0, 1], sizes = [32, 1], strides = [1, 1]} : vector<32x2xf32> to vector<32x1xf32>
    %24 = arith.addf %22, %23 : vector<32x1xf32>
    %25 = arith.negf %24 : vector<32x1xf32>
    %26 = math.exp %25 : vector<32x1xf32>
    %cst_11 = arith.constant 1.000000e+00 : f32
    %27 = vector.broadcast %cst_11 : f32 to vector<32x1xf32>
    %28 = arith.addf %27, %26 : vector<32x1xf32>
    %29 = arith.divf %27, %28 : vector<32x1xf32>
    %30 = vector.broadcast %29 : vector<32x1xf32> to vector<32x256xf32>
    %31 = arith.mulf %1, %30 : vector<32x256xf32>
    %c0_12 = arith.constant 0 : index
    %c0_13 = arith.constant 0 : index
    %c0_14 = arith.constant 0 : index
    %32 = vector.load %arg4[%c0_12, %c0_13, %c0_14] : memref<1x32x256xf32, #tpu.memory_space<vmem>>, vector<1x32x256xf32>
    %33 = vector.shape_cast %32 : vector<1x32x256xf32> to vector<32x256xf32>
    %34 = vector.shape_cast %31 : vector<32x256xf32> to vector<1x32x256xf32>
    tpu.vector_store %arg4[%c0_12, %c0_13, %c0_14], %34 {strides = array<i32>} : memref<1x32x256xf32, #tpu.memory_space<vmem>>, vector<1x32x256xf32>,
    return
  }
  func.func @transform_0(%arg0: i32) -> (i32, i32, i32) {
    %c0_i32 = arith.constant 0 : i32
    %c0_i32_0 = arith.constant 0 : i32
    %c0_i32_1 = arith.constant 0 : i32
    return %arg0, %c0_i32, %c0_i32_0 : i32, i32, i32
  }
  func.func @transform_1(%arg0: i32) -> (i32, i32) {
    %c0_i32 = arith.constant 0 : i32
    %c0_i32_0 = arith.constant 0 : i32
    %c0_i32_1 = arith.constant 0 : i32
    return %c0_i32, %c0_i32_0 : i32, i32
  }
  func.func @transform_2(%arg0: i32) -> (i32, i32) {
    %c0_i32 = arith.constant 0 : i32
    %c0_i32_0 = arith.constant 0 : i32
    %c0_i32_1 = arith.constant 0 : i32
    return %c0_i32, %c0_i32_0 : i32, i32
  }
  func.func @transform_3(%arg0: i32) -> (i32, i32, i32) {
    %c0_i32 = arith.constant 0 : i32
    %c0_i32_0 = arith.constant 0 : i32
    %c0_i32_1 = arith.constant 0 : i32
    return %arg0, %c0_i32, %c0_i32_0 : i32, i32, i32
  }
}

</mosaic_0001>

<llo_original>
// kernel: tpu_custom_call.1
$region0: #{tpu_custom_call.1}
  #allocation0 [shape = 'u32[]', space=smem, size = 0x4, offset = 0x4, fixed_abs, tag = 'smem constant byte address 0x4 - core index']
  #allocation1 [shape = 'u32[144,128]{1,0:T(1,128)}', space=vmem, size = 0x12000, scoped, tag = 'internal scratch']
  %s0 = inlined_call_operand.hbm [shape: f32[2,32,256], index: 0, kind: input, shape index: {}]
  %s1 = inlined_call_operand.vmem [shape: f32[2,32], index: 1, kind: input, shape index: {}]
  %s2 = inlined_call_operand.vmem [shape: f32[32,2], index: 2, kind: input, shape index: {}]
  %s3 = inlined_call_operand.hbm [shape: f32[2,32,256], index: 3, kind: output, shape index: {}]
  %s4 = sld [smem:[#allocation0]]
  $region49: #{tpu_custom_call.1} parent=0
    _
  %s6 = ssub.s32 1, %s4
  %s7 = scalar_select 0, %s6, %s4
  $region1: #{tpu_custom_call.1} parent=0
    #allocation2 [shape = 'u8[65536]{0}', space=vmem, size = 0x10000, scoped, tag = 'input window, operand 0']
    #allocation3 [shape = 's32[2]{0}', space=sflag, size = 0x8, scoped, tag = 'scoped memory for tpu_custom_call.1']
    #allocation4 [shape = 's32[2]{0}', space=sflag, size = 0x8, scoped, tag = 'scoped memory for tpu_custom_call.1']
    #allocation5 [shape = 'u8[65536]{0}', space=vmem, size = 0x10000, scoped, tag = 'output window, operand 0']
    %8 = vsyncpa [#allocation3], 0
    %s9 = scalar_lea.sflag [#allocation3], 1
    %10 = vsyncpa %s9, 0
    %11 = vsyncpa [#allocation4], 0
    %s12 = scalar_lea.sflag [#allocation4], 1
    %13 = vsyncpa %s12, 0
    loop: start=0, step=1, limit=4
    $region2: #{tpu_custom_call.1} parent=1 // loop_pre_header
      _
    $region3: #{tpu_custom_call.1} parent=1 // loop_header
      %s15 = sphi 0, %s19
      %p16 = scmp.ge.s32.totalorder %s15, 4
      %s25 = sphi 0, %s27
      %s28 = sphi 0, %s25
      %s29 = sphi 0, %s28
      %s45 = sphi 0, %s29
      %s49 = sphi 0, %s49
      %s51 = sphi 0, %s49
      %s52 = sphi 0, %s51
      %s66 = sphi 0, %s52
      %s70 = sphi 0, %s70
      %s72 = sphi 0, %s70
      %s73 = sphi 0, %s72
      %s87 = sphi 0, %s73
      %s93 = sphi 0, %s95
      %s96 = sphi 0, %s93
      %s97 = sphi 0, %s96
      %s113 = sphi 0, %s97
    $region4: #{tpu_custom_call.1} parent=1 // loop_header_branch
      %18 = sbr.rel (%p16) target = $region8
    $region5: #{tpu_custom_call.1} parent=1 // loop_body
      %s20 = ssub.s32 %s15, 1
      %s21 = ssub.s32 %s15, 2
      %s22 = sadd.s32 %s15, 1
      %s23 = ssub.s32 %s15, %s22
      %p24 = scmp.eq.s32.totalorder %s23, 0
      %s26 = sadd.s32 %s25, 1
      %s27 = scalar_select %p24, %s25, %s26
      %p30 = pneg %p24
      %p31 = scmp.eq.s32.totalorder %s15, 1
      %p32 = por %p30, %p31
      %p33 = scmp.ne.s32.totalorder %s25, %s28
      %p34 = scmp.eq.s32.totalorder %s15, 0
      %p35 = por %p33, %p34
      %p36 = scmp.ne.s32.totalorder %s25, %s28
      %p37 = scmp.eq.s32.totalorder %s20, 1
      %p38 = por %p36, %p37
      %p39 = scmp.ne.s32.totalorder %s28, %s29
      %p40 = scmp.eq.s32.totalorder %s20, 0
      %p41 = por %p39, %p40
      %p42 = scmp.ne.s32.totalorder %s28, %s29
      %p43 = scmp.eq.s32.totalorder %s21, 1
      %p44 = por %p42, %p43
      %p46 = scmp.ne.s32.totalorder %s29, %s45
      %p47 = scmp.eq.s32.totalorder %s21, 0
      %p48 = por %p46, %p47
      %s50 = sadd.s32 %s49, 1
      %p53 = scmp.eq.s32.totalorder %s15, 1
      %p54 = scmp.ne.s32.totalorder %s49, %s51
      %p55 = scmp.eq.s32.totalorder %s15, 0
      %p56 = por %p54, %p55
      %p57 = scmp.ne.s32.totalorder %s49, %s51
      %p58 = scmp.eq.s32.totalorder %s20, 1
      %p59 = por %p57, %p58
      %p60 = scmp.ne.s32.totalorder %s51, %s52
      %p61 = scmp.eq.s32.totalorder %s20, 0
      %p62 = por %p60, %p61
      %p63 = scmp.ne.s32.totalorder %s51, %s52
      %p64 = scmp.eq.s32.totalorder %s21, 1
      %p65 = por %p63, %p64
      %p67 = scmp.ne.s32.totalorder %s52, %s66
      %p68 = scmp.eq.s32.totalorder %s21, 0
      %p69 = por %p67, %p68
      %s71 = sadd.s32 %s70, 1
      %p74 = scmp.eq.s32.totalorder %s15, 1
      %p75 = scmp.ne.s32.totalorder %s70, %s72
      %p76 = scmp.eq.s32.totalorder %s15, 0
      %p77 = por %p75, %p76
      %p78 = scmp.ne.s32.totalorder %s70, %s72
      %p79 = scmp.eq.s32.totalorder %s20, 1
      %p80 = por %p78, %p79
      %p81 = scmp.ne.s32.totalorder %s72, %s73
      %p82 = scmp.eq.s32.totalorder %s20, 0
      %p83 = por %p81, %p82
      %p84 = scmp.ne.s32.totalorder %s72, %s73
      %p85 = scmp.eq.s32.totalorder %s21, 1
      %p86 = por %p84, %p85
      %p88 = scmp.ne.s32.totalorder %s73, %s87
      %p89 = scmp.eq.s32.totalorder %s21, 0
      %p90 = por %p88, %p89
      %s91 = ssub.s32 %s15, %s22
      %p92 = scmp.eq.s32.totalorder %s91, 0
      %s94 = sadd.s32 %s93, 1
      %s95 = scalar_select %p92, %s93, %s94
      %p98 = pneg %p92
      %p99 = scmp.eq.s32.totalorder %s15, 1
      %p100 = por %p98, %p99
      %p101 = scmp.ne.s32.totalorder %s93, %s96
      %p102 = scmp.eq.s32.totalorder %s15, 0
      %p103 = por %p101, %p102
      %p104 = scmp.ne.s32.totalorder %s93, %s96
      %p105 = scmp.eq.s32.totalorder %s20, 1
      %p106 = por %p104, %p105
      %p107 = scmp.ne.s32.totalorder %s96, %s97
      %p108 = scmp.eq.s32.totalorder %s20, 0
      %p109 = por %p107, %p108
      %p110 = scmp.ne.s32.totalorder %s96, %s97
      %p111 = scmp.eq.s32.totalorder %s21, 1
      %p112 = por %p110, %p111
      %p114 = scmp.ne.s32.totalorder %s97, %s113
      %p115 = scmp.eq.s32.totalorder %s21, 0
      %p116 = por %p114, %p115
      %p117 = scmp.le.s32.totalorder 1, %s15
      %p118 = scmp.lt.s32.totalorder %s15, 3
      %p119 = pnand %p117, %p118
      %p120 = pneg %p119
      // Predicated region
      $region9: #{tpu_custom_call.1} parent=5 // pred_check
        _
      $region10: #{tpu_custom_call.1} parent=5 // pred_check_branch
        %122 = sbr.rel (%p119) target = $region12
      $region11: #{tpu_custom_call.1} parent=5 // pred_region
        %s123 = ssub.s32 %s15, 1
        // Predicated region
        $region13: #{tpu_custom_call.1} parent=11 // pred_check
          %p124 = pneg %p62
        $region14: #{tpu_custom_call.1} parent=11 // pred_check_branch
          %126 = sbr.rel (%p124) target = $region16
        $region15: #{tpu_custom_call.1} parent=11 // pred_region
          _
        $region16: #{tpu_custom_call.1} parent=11 // pred_fallthru
          _
        // Predicated region
        $region17: #{tpu_custom_call.1} parent=11 // pred_check
          %p127 = pneg %p83
        $region18: #{tpu_custom_call.1} parent=11 // pred_check_branch
          %129 = sbr.rel (%p127) target = $region20
        $region19: #{tpu_custom_call.1} parent=11 // pred_region
          _
        $region20: #{tpu_custom_call.1} parent=11 // pred_fallthru
          _
      $region12: #{tpu_custom_call.1} parent=5 // pred_fallthru
        _
      %p130 = scmp.lt.s32.totalorder %s15, 2
      // Predicated region
      $region21: #{tpu_custom_call.1} parent=5 // pred_check
        %p131 = pneg %p130
      $region22: #{tpu_custom_call.1} parent=5 // pred_check_branch
        %133 = sbr.rel (%p131) target = $region24
      $region23: #{tpu_custom_call.1} parent=5 // pred_region
        // Predicated region
        $region25: #{tpu_custom_call.1} parent=23 // pred_check
          %p134 = pneg %p35
        $region26: #{tpu_custom_call.1} parent=23 // pred_check_branch
          %136 = sbr.rel (%p134) target = $region28
        $region27: #{tpu_custom_call.1} parent=23 // pred_region
          %s137 = sand.u32 %s25, 1
          %s138 = scalar_lea.sflag [#allocation3], %s137
          %s139 = sand.u32 %s25, 1
          %s140 = smul.addr %s139, 64
          %s141 = scalar_lea.vmem [#allocation2], %s140
          %s143 = ssub.s32 1024, 1024
          %144 = vsyncadd %s138, %s143
          %s145 = smul.addr %s15, 8
          %s146 = smul.addr %s145, 128
          %s147 = scalar_lea.hbm %s0, %s146
          %s148 = sshll.u32 %s141, 4
          %s149 = int_to_ptr.vmem [resolvable:$true] %s148
          %154 = dma.hbm_to_vmem [thread:$0]  %s147, 1024, %s149, %s138, 256, 256, 16
        $region28: #{tpu_custom_call.1} parent=23 // pred_fallthru
          _
      $region24: #{tpu_custom_call.1} parent=5 // pred_fallthru
        _
      %p155 = scmp.le.s32.totalorder 1, %s15
      %p156 = scmp.lt.s32.totalorder %s15, 3
      %p157 = pnand %p155, %p156
      %p158 = pneg %p157
      // Predicated region
      $region29: #{tpu_custom_call.1} parent=5 // pred_check
        _
      $region30: #{tpu_custom_call.1} parent=5 // pred_check_branch
        %160 = sbr.rel (%p157) target = $region32
      $region31: #{tpu_custom_call.1} parent=5 // pred_region
        %s161 = ssub.s32 %s15, 1
        %s162 = sand.u32 %s28, 1
        %s163 = scalar_lea.sflag [#allocation3], %s162
        %s164 = sand.u32 %s28, 1
        %s165 = smul.addr %s164, 64
        %s166 = scalar_lea.vmem [#allocation2], %s165
        // Predicated region
        $region33: #{tpu_custom_call.1} parent=31 // pred_check
          %p167 = pneg %p41
        $region34: #{tpu_custom_call.1} parent=31 // pred_check_branch
          %169 = sbr.rel (%p167) target = $region36
        $region35: #{tpu_custom_call.1} parent=31 // pred_region
          %170 = dma.done %s163, 1024
        $region36: #{tpu_custom_call.1} parent=31 // pred_fallthru
          _
        %s171 = sand.u32 %s28, 1
        %s172 = scalar_lea.sflag [#allocation3], %s171
        %s173 = sand.u32 %s28, 1
        %s174 = smul.addr %s173, 64
        %s175 = scalar_lea.vmem [#allocation2], %s174
        %p176 = pneg %p41
        %p177 = pneg %p38
        %p178 = pneg %p62
        %p179 = pneg %p59
        %p180 = pneg %p83
        %p181 = pneg %p80
        %p182 = pneg %p109
        %p183 = pneg %p106
        %s184 = sand.u32 %s96, 1
        %s185 = scalar_lea.sflag [#allocation4], %s184
        %s186 = sand.u32 %s96, 1
        %s187 = smul.addr %s186, 64
        %s188 = scalar_lea.vmem [#allocation5], %s187
        %v189 = vld [vmem:[%s166] sm:$0xff]
        %v190 = vld [vmem:[%s166 + $0x8] sm:$0xff]
        %v191 = vld [vmem:[%s166 + $0x10] sm:$0xff]
        %v192 = vld [vmem:[%s166 + $0x18] sm:$0xff]
        %v193 = vld [vmem:[%s166 + $0x20] sm:$0xff]
        %v194 = vld [vmem:[%s166 + $0x28] sm:$0xff]
        %v195 = vld [vmem:[%s166 + $0x30] sm:$0xff]
        %v196 = vld [vmem:[%s166 + $0x38] sm:$0xff]
        %v197 = vadd.f32 %v189, %v190
        %198 = vadd.xlane.f32.xlu0 %v197
        %v199 = vpop.xlane.xlu0 %198
        %v200 = vadd.f32 %v191, %v192
        %201 = vadd.xlane.f32.xlu0 %v200
        %v202 = vpop.xlane.xlu0 %201
        %v203 = vadd.f32 %v193, %v194
        %204 = vadd.xlane.f32.xlu0 %v203
        %v205 = vpop.xlane.xlu0 %204
        %v206 = vadd.f32 %v195, %v196
        %207 = vadd.xlane.f32.xlu0 %v206
        %v208 = vpop.xlane.xlu0 %207
        %v209 = vmax.f32 %v189, %v190
        %210 = vmax.xlane.f32.xlu0 %v209
        %v211 = vpop.xlane.xlu0 %210
        %v212 = vmax.f32 %v191, %v192
        %213 = vmax.xlane.f32.xlu0 %v212
        %v214 = vpop.xlane.xlu0 %213
        %v215 = vmax.f32 %v193, %v194
        %216 = vmax.xlane.f32.xlu0 %v215
        %v217 = vpop.xlane.xlu0 %216
        %v218 = vmax.f32 %v195, %v196
        %219 = vmax.xlane.f32.xlu0 %v218
        %v220 = vpop.xlane.xlu0 %219
        %v221 = vmul.f32 %v199, 0.00390625
        %v222 = vmul.f32 %v202, 0.00390625
        %v223 = vmul.f32 %v205, 0.00390625
        %v224 = vmul.f32 %v208, 0.00390625
        %v225 = vlaneseq
        %v226 = vand.u32 %v225, 127
        %vm227 = vcmp.eq.s32.totalorder %v226, 0
        %v228 = vsel %vm227, %v221, %v211
        %v229 = vsel %vm227, %v222, %v214
        %v230 = vsel %vm227, %v223, %v217
        %v231 = vsel %vm227, %v224, %v220
        %v232 = vld [vmem:[%s1] sm:$0x3]
        %vm233 = vcmask 261120
        %v235 = vsel %vm233, %v232, 0
        %237 = vmatprep.subr.mxu0 0.0
        %238 = vmatpush1.msra.mxu0 %v228
        %239 = vmatprep.subr.mxu0 0.0
        %240 = vmatpush1.msra.mxu0 %v229
        %241 = vmatprep.subr.mxu0 0.0
        %242 = vmatpush1.msra.mxu0 %v230
        %243 = vmatprep.subr.mxu0 0.0
        %244 = vmatpush1.msra.mxu0 %v231
        %245 = vmatprep.subr.mxu0 0.0
        %246 = vmatpush1.msra.mxu0 0.0
        %247 = vmatprep.subr.mxu0 0.0
        %248 = vmatpush1.msra.mxu0 0.0
        %249 = vmatprep.subr.mxu0 0.0
        %250 = vmatpush1.msra.mxu0 0.0
        %251 = vmatprep.subr.mxu0 0.0
        %252 = vmatpush1.msra.mxu0 0.0
        %253 = vmatprep.subr.mxu0 0.0
        %254 = vmatpush1.msra.mxu0 0.0
        %255 = vmatprep.subr.mxu0 0.0
        %256 = vmatpush1.msra.mxu0 0.0
        %257 = vmatprep.subr.mxu0 0.0
        %258 = vmatpush1.msra.mxu0 0.0
        %259 = vmatprep.subr.mxu0 0.0
        %260 = vmatpush1.msra.mxu0 0.0
        %261 = vmatprep.subr.mxu0 0.0
        %262 = vmatpush1.msra.mxu0 0.0
        %263 = vmatprep.subr.mxu0 0.0
        %264 = vmatpush1.msra.mxu0 0.0
        %265 = vmatprep.subr.mxu0 0.0
        %266 = vmatpush1.msra.mxu0 0.0
        %267 = vmatprep.subr.mxu0 0.0
        %268 = vmatpush1.msra.mxu0 0.0
        %269 = vmatprep.subr.mxu0 0.0
        %270 = vmatpush1.msra.mxu0 0.0
        %271 = vmatprep.subr.mxu0 0.0
        %272 = vmatpush1.msra.mxu0 0.0
        %273 = vmatprep.subr.mxu0 0.0
        %274 = vmatpush1.msra.mxu0 0.0
        %275 = vmatprep.subr.mxu0 0.0
        %276 = vmatpush1.msra.mxu0 0.0
        %277 = vmatprep.subr.mxu0 0.0
        %278 = vmatpush1.msra.mxu0 0.0
        %279 = vmatprep.subr.mxu0 0.0
        %280 = vmatpush1.msra.mxu0 0.0
        %281 = vmatprep.subr.mxu0 0.0
        %282 = vmatpush1.msra.mxu0 0.0
        %283 = vmatprep.subr.mxu0 0.0
        %284 = vmatpush1.msra.mxu0 0.0
        %285 = vmatprep.subr.mxu0 0.0
        %286 = vmatpush1.msra.mxu0 0.0
        %287 = vmatprep.subr.mxu0 0.0
        %288 = vmatpush1.msra.mxu0 0.0
        %289 = vmatprep.subr.mxu0 0.0
        %290 = vmatpush1.msra.mxu0 0.0
        %291 = vmatprep.subr.mxu0 0.0
        %292 = vmatpush1.msra.mxu0 0.0
        %293 = vmatprep.subr.mxu0 0.0
        %294 = vmatpush1.msra.mxu0 0.0
        %295 = vmatprep.subr.mxu0 0.0
        %296 = vmatpush1.msra.mxu0 0.0
        %297 = vmatprep.subr.mxu0 0.0
        %298 = vmatpush1.msra.mxu0 0.0
        %299 = vmatprep.subr.mxu0 0.0
        %300 = vmatpush1.msra.mxu0 0.0
        %301 = vmatprep.mubr.f32.mxu0 0.0
        %302 = vmatmul.mubr.f32.gmra.mrb[0].mxu0 %v235
        %v303 = vpop.f32.mrb[0].mxu0
        %v304 = vadd.f32 0.0, %v303
        %v305 = vpop.f32.mrb[0].mxu0
        %306 = vdwg.mxu0
        %v307 = vmax.f32 %v304, 0.0
        %v308 = vld [vmem:[%s2] sm:$0xff]
        %v309 = vld [vmem:[%s2 + $0x8] sm:$0xff]
        %v310 = vld [vmem:[%s2 + $0x10] sm:$0xff]
        %v311 = vld [vmem:[%s2 + $0x18] sm:$0xff]
        %vm312 = vcmask 15360
        %v314 = vsel %vm312, %v308, 0
        %v317 = vsel %vm312, %v309, 0
        %v320 = vsel %vm312, %v310, 0
        %v323 = vsel %vm312, %v311, 0
        %vm325 = vcmask 1041408
        %v327 = vsel %vm325, %v307, 0
        %329 = vmatprep.subr.mxu0 0.0
        %330 = vmatpush1.msra.mxu0 %v327
        %331 = vmatprep.subr.mxu0 0.0
        %332 = vmatpush1.msra.mxu0 0.0
        %333 = vmatprep.subr.mxu0 0.0
        %334 = vmatpush1.msra.mxu0 0.0
        %335 = vmatprep.subr.mxu0 0.0
        %336 = vmatpush1.msra.mxu0 0.0
        %337 = vmatprep.subr.mxu0 0.0
        %338 = vmatpush1.msra.mxu0 0.0
        %339 = vmatprep.subr.mxu0 0.0
        %340 = vmatpush1.msra.mxu0 0.0
        %341 = vmatprep.subr.mxu0 0.0
        %342 = vmatpush1.msra.mxu0 0.0
        %343 = vmatprep.subr.mxu0 0.0
        %344 = vmatpush1.msra.mxu0 0.0
        %345 = vmatprep.subr.mxu0 0.0
        %346 = vmatpush1.msra.mxu0 0.0
        %347 = vmatprep.subr.mxu0 0.0
        %348 = vmatpush1.msra.mxu0 0.0
        %349 = vmatprep.subr.mxu0 0.0
        %350 = vmatpush1.msra.mxu0 0.0
        %351 = vmatprep.subr.mxu0 0.0
        %352 = vmatpush1.msra.mxu0 0.0
        %353 = vmatprep.subr.mxu0 0.0
        %354 = vmatpush1.msra.mxu0 0.0
        %355 = vmatprep.subr.mxu0 0.0
        %356 = vmatpush1.msra.mxu0 0.0
        %357 = vmatprep.subr.mxu0 0.0
        %358 = vmatpush1.msra.mxu0 0.0
        %359 = vmatprep.subr.mxu0 0.0
        %360 = vmatpush1.msra.mxu0 0.0
        %361 = vmatprep.subr.mxu0 0.0
        %362 = vmatpush1.msra.mxu0 0.0
        %363 = vmatprep.subr.mxu0 0.0
        %364 = vmatpush1.msra.mxu0 0.0
        %365 = vmatprep.subr.mxu0 0.0
        %366 = vmatpush1.msra.mxu0 0.0
        %367 = vmatprep.subr.mxu0 0.0
        %368 = vmatpush1.msra.mxu0 0.0
        %369 = vmatprep.subr.mxu0 0.0
        %370 = vmatpush1.msra.mxu0 0.0
        %371 = vmatprep.subr.mxu0 0.0
        %372 = vmatpush1.msra.mxu0 0.0
        %373 = vmatprep.subr.mxu0 0.0
        %374 = vmatpush1.msra.mxu0 0.0
        %375 = vmatprep.subr.mxu0 0.0
        %376 = vmatpush1.msra.mxu0 0.0
        %377 = vmatprep.subr.mxu0 0.0
        %378 = vmatpush1.msra.mxu0 0.0
        %379 = vmatprep.subr.mxu0 0.0
        %380 = vmatpush1.msra.mxu0 0.0
        %381 = vmatprep.subr.mxu0 0.0
        %382 = vmatpush1.msra.mxu0 0.0
        %383 = vmatprep.subr.mxu0 0.0
        %384 = vmatpush1.msra.mxu0 0.0
        %385 = vmatprep.subr.mxu0 0.0
        %386 = vmatpush1.msra.mxu0 0.0
        %387 = vmatprep.subr.mxu0 0.0
        %388 = vmatpush1.msra.mxu0 0.0
        %389 = vmatprep.subr.mxu0 0.0
        %390 = vmatpush1.msra.mxu0 0.0
        %391 = vmatprep.subr.mxu0 0.0
        %392 = vmatpush1.msra.mxu0 0.0
        %393 = vmatprep.mubr.f32.mxu0 0.0
        %394 = vmatmul.mubr.f32.gmra.mrb[0].mxu0 %v314
        %v395 = vpop.f32.mrb[0].mxu0
        %v396 = vadd.f32 0.0, %v395
        %v397 = vpop.f32.mrb[0].mxu0
        %398 = vmatprep.mubr.f32.mxu0 0.0
        %399 = vmatmul.mubr.f32.gmra.mrb[0].mxu0 %v317
        %v400 = vpop.f32.mrb[0].mxu0
        %v401 = vadd.f32 0.0, %v400
        %v402 = vpop.f32.mrb[0].mxu0
        %403 = vmatprep.mubr.f32.mxu0 0.0
        %404 = vmatmul.mubr.f32.gmra.mrb[0].mxu0 %v320
        %v405 = vpop.f32.mrb[0].mxu0
        %v406 = vadd.f32 0.0, %v405
        %v407 = vpop.f32.mrb[0].mxu0
        %408 = vmatprep.mubr.f32.mxu0 0.0
        %409 = vmatmul.mubr.f32.gmra.mrb[0].mxu0 %v323
        %v410 = vpop.f32.mrb[0].mxu0
        %v411 = vadd.f32 0.0, %v410
        %v412 = vpop.f32.mrb[0].mxu0
        %413 = vdwg.mxu0
        %418 = vrot.lane.b32.xlu0 %v396, 127
        %v419 = vpop.permute.xlu0 %418
        %420 = vrot.lane.b32.xlu0 %v401, 127
        %v421 = vpop.permute.xlu0 %420
        %422 = vrot.lane.b32.xlu0 %v406, 127
        %v423 = vpop.permute.xlu0 %422
        %424 = vrot.lane.b32.xlu0 %v411, 127
        %v425 = vpop.permute.xlu0 %424
        %v430 = vadd.f32 %v396, %v419
        %v431 = vadd.f32 %v401, %v421
        %v432 = vadd.f32 %v406, %v423
        %v433 = vadd.f32 %v411, %v425
        %v434 = vxor.u32 %v430, 2147483648
        %v435 = vxor.u32 %v431, 2147483648
        %v436 = vxor.u32 %v432, 2147483648
        %v437 = vxor.u32 %v433, 2147483648
        %v438 = vmul.f32 %v434, 1.442695
        %v439 = vpow.pop %v438
        %v440 = vmul.f32 %v435, 1.442695
        %v441 = vpow.pop %v440
        %v442 = vmul.f32 %v436, 1.442695
        %v443 = vpow.pop %v442
        %v444 = vmul.f32 %v437, 1.442695
        %v445 = vpow.pop %v444
        %v446 = vadd.f32 %v439, 1.0
        %v447 = vadd.f32 %v441, 1.0
        %v448 = vadd.f32 %v443, 1.0
        %v449 = vadd.f32 %v445, 1.0
        %v450 = vrcp.pop %v446
        %v451 = vmul.f32 1.0, %v450
        %v452 = vrcp.pop %v447
        %v453 = vmul.f32 1.0, %v452
        %v454 = vrcp.pop %v448
        %v455 = vmul.f32 1.0, %v454
        %v456 = vrcp.pop %v449
        %v457 = vmul.f32 1.0, %v456
        %459 = vset.pattern.permute.xlu0 0
        %460 = vperm.xlu0 %459, %v451
        %v461 = vpop.permute.xlu0 %460
        %464 = vset.pattern.permute.xlu0 0
        %465 = vperm.xlu0 %464, %v453
        %v466 = vpop.permute.xlu0 %465
        %469 = vset.pattern.permute.xlu0 0
        %470 = vperm.xlu0 %469, %v455
        %v471 = vpop.permute.xlu0 %470
        %474 = vset.pattern.permute.xlu0 0
        %475 = vperm.xlu0 %474, %v457
        %v476 = vpop.permute.xlu0 %475
        %v478 = vmul.f32 %v189, %v461
        %v479 = vmul.f32 %v190, %v461
        %v480 = vmul.f32 %v191, %v466
        %v481 = vmul.f32 %v192, %v466
        %v482 = vmul.f32 %v193, %v471
        %v483 = vmul.f32 %v194, %v471
        %v484 = vmul.f32 %v195, %v476
        %v485 = vmul.f32 %v196, %v476
        %486 = vst [vmem:[%s188] sm:$0xff] %v478
        %487 = vst [vmem:[%s188 + $0x8] sm:$0xff] %v479
        %488 = vst [vmem:[%s188 + $0x10] sm:$0xff] %v480
        %489 = vst [vmem:[%s188 + $0x18] sm:$0xff] %v481
        %490 = vst [vmem:[%s188 + $0x20] sm:$0xff] %v482
        %491 = vst [vmem:[%s188 + $0x28] sm:$0xff] %v483
        %492 = vst [vmem:[%s188 + $0x30] sm:$0xff] %v484
        %493 = vst [vmem:[%s188 + $0x38] sm:$0xff] %v485
        %s494 = sand.u32 %s96, 1
        %s495 = scalar_lea.sflag [#allocation4], %s494
        %s496 = sand.u32 %s96, 1
        %s497 = smul.addr %s496, 64
        %s498 = scalar_lea.vmem [#allocation5], %s497
        // Predicated region
        $region37: #{tpu_custom_call.1} parent=31 // pred_check
          %p499 = pneg %p106
        $region38: #{tpu_custom_call.1} parent=31 // pred_check_branch
          %501 = sbr.rel (%p499) target = $region40
        $region39: #{tpu_custom_call.1} parent=31 // pred_region
          %s503 = ssub.s32 1024, 1024
          %504 = vsyncadd %s495, %s503
          %s505 = smul.addr %s20, 8
          %s506 = smul.addr %s505, 128
          %s507 = scalar_lea.hbm %s3, %s506
          %s508 = sshll.u32 %s498, 4
          %s509 = int_to_ptr.vmem [resolvable:$true] %s508
          %514 = dma.vmem_to_hbm [thread:$0]  %s509, 1024, %s507, %s495, 256, 256, 16
        $region40: #{tpu_custom_call.1} parent=31 // pred_fallthru
          _
      $region32: #{tpu_custom_call.1} parent=5 // pred_fallthru
        _
      %p515 = scmp.le.s32.totalorder 2, %s15
      // Predicated region
      $region41: #{tpu_custom_call.1} parent=5 // pred_check
        %p516 = pneg %p515
      $region42: #{tpu_custom_call.1} parent=5 // pred_check_branch
        %518 = sbr.rel (%p516) target = $region44
      $region43: #{tpu_custom_call.1} parent=5 // pred_region
        %s519 = ssub.s32 %s15, 2
        // Predicated region
        $region45: #{tpu_custom_call.1} parent=43 // pred_check
          %p520 = pneg %p112
        $region46: #{tpu_custom_call.1} parent=43 // pred_check_branch
          %522 = sbr.rel (%p520) target = $region48
        $region47: #{tpu_custom_call.1} parent=43 // pred_region
          %s523 = sand.u32 %s97, 1
          %s524 = scalar_lea.sflag [#allocation4], %s523
          %s525 = sand.u32 %s97, 1
          %s526 = smul.addr %s525, 64
          %s527 = scalar_lea.vmem [#allocation5], %s526
          %528 = dma.done %s524, 1024
        $region48: #{tpu_custom_call.1} parent=43 // pred_fallthru
          _
      $region44: #{tpu_custom_call.1} parent=5 // pred_fallthru
        _
    $region6: #{tpu_custom_call.1} parent=1 // loop_footer
      %s19 = sadd.s32 1, %s15
    $region7: #{tpu_custom_call.1} parent=1 // loop_footer_branch
      %14 = sbr.rel target = $region3
    $region8: #{tpu_custom_call.1} parent=1 // loop_exit
      _
    %529 = vsyncpa [#allocation3], 1
    %s530 = scalar_lea.sflag [#allocation3], 1
    %531 = vsyncpa %s530, 1
    %532 = vsyncpa [#allocation4], 1
    %s533 = scalar_lea.sflag [#allocation4], 1
    %534 = vsyncpa %s533, 1

</llo_original>
